<compile_context>
chip_gen: v7x
topology: tpu7x:2x2x1
jax: 0.10.0
libtpu: 0.0.40
codegen_flags: <defaults>
</compile_context>

<pallas_src>
import functools
import math

import jax
import jax.numpy as jnp
from jax import lax
from jax.experimental import pallas as pl
from jax.experimental.pallas import tpu as pltpu


def _leaky(x, slope=0.2):
    return jnp.where(x > 0, x, slope * x)


def _vinverted_kernel(fuse_shortcut, cast_dtype,
                      x_ref, mask_ref, w1_ref, b1_ref, dw_ref, bdw_ref,
                      w2_ref, b2_ref, o_ref):
    x = x_ref[...]                                   # (C, bc)
    bc = x.shape[1]

    def mm(a, b):
        if cast_dtype is not None:
            a = a.astype(cast_dtype)
            b = b.astype(cast_dtype)
        return jnp.dot(a, b, preferred_element_type=jnp.float32)

    # --- 1x1 expansion conv + LeakyReLU(0.2) --------------------------------
    h1 = mm(w1_ref[...], x) + b1_ref[...]            # (Ce, bc) + (Ce, 1)
    h1 = _leaky(h1)

    # --- depthwise (1,3) conv along W (lane axis), padding=(0,1) ------------
    # Neighbours come from XLU lane rolls; wrap-around at image-row boundaries
    # is zeroed with the precomputed per-column masks (valid where w>0 / w<W-1).
    lmask = mask_ref[0:1, :]                         # (1, bc)
    rmask = mask_ref[1:2, :]                         # (1, bc)
    left = jnp.where(lmask > 0, pltpu.roll(h1, shift=1, axis=1), 0.0)
    right = jnp.where(rmask > 0, pltpu.roll(h1, shift=bc - 1, axis=1), 0.0)
    dw = dw_ref[...]                                 # (Ce, 3)
    h2 = (left * dw[:, 0:1] + h1 * dw[:, 1:2] + right * dw[:, 2:3]
          + bdw_ref[...])
    h2 = _leaky(h2)

    # --- 1x1 projection conv (+ fused 1x1 shortcut via K-concat) ------------
    acts = jnp.concatenate([h2, x], axis=0) if fuse_shortcut else h2
    out = mm(w2_ref[...], acts) + b2_ref[...]        # (Co, bc)
    o_ref[...] = out.astype(o_ref.dtype)


def _vmem_limit_bytes():
    try:
        cap = int(pltpu.get_tpu_info().vmem_capacity_bytes)
    except Exception:
        cap = 64 * 1024 * 1024            # conservative fallback (v7x physical)
    return int(min(cap * 3 // 4, 100 * 1024 * 1024))


def _choose_block_cols(total, W, C, Ce, Co, budget_bytes):
    """Largest column tile (multiple of lcm(W,128)) whose live f32 data fits."""
    rup = lambda v, m: -(-v // m) * m
    # per-column f32 bytes: 2x double-buffered input, ~6x Ce-wide intermediates
    # (h1 / rolls / h2 / dot temps), 2x double-buffered output.
    per_col = 4 * (2 * rup(C, 8) + 6 * rup(Ce, 8) + 2 * rup(Co, 8))
    unit = (W * 128) // math.gcd(W, 128)  # keep block starts W- and lane-aligned
    bc = max(unit, (budget_bytes // per_col) // unit * unit)
    return int(total) if bc >= total else int(bc)


def init_params(key, in_channel, out_channel, expansion, use_shortcut):
    """Deterministic synthetic parameters (kernel layout, not OIHW)."""
    ce = in_channel * expansion
    ks = jax.random.split(key, 8)
    p = {
        "w1":  0.2 * jax.random.normal(ks[0], (in_channel, ce), jnp.float32),
        "b1":  0.1 * jax.random.normal(ks[1], (1, ce), jnp.float32),
        "dw":  0.2 * jax.random.normal(ks[2], (3, ce), jnp.float32),
        "bdw": 0.1 * jax.random.normal(ks[3], (1, ce), jnp.float32),
        "w2":  0.2 * jax.random.normal(ks[4], (ce, out_channel), jnp.float32),
        "b2":  0.1 * jax.random.normal(ks[5], (1, out_channel), jnp.float32),
    }
    if use_shortcut:
        p["ws"] = 0.2 * jax.random.normal(ks[6], (in_channel, out_channel),
                                          jnp.float32)
        p["bs"] = 0.1 * jax.random.normal(ks[7], (1, out_channel), jnp.float32)
    return p


def vinverted_block(x_nchw, params, *, in_channel, out_channel, expansion=4,
                    stride=(1, 1), block_cols=None, matmul_dtype=None):
    """Forward pass matching the PyTorch VInvertedBlock module.

    x_nchw: (N, C_in, H, W) float32.  Returns (N, C_out, H', W').
    matmul_dtype: optionally cast MXU operands (e.g. jnp.bfloat16 on v6e/v7x)
      while keeping f32 accumulation; None keeps exact f32 numerics.
    """
    N, C, H, W = x_nchw.shape
    assert C == in_channel
    Ce = in_channel * expansion
    Co = out_channel
    use_shortcut = (in_channel != out_channel) and (stride == (1, 1))

    total = N * H * W
    # NCHW -> channels-first flat pixels: (C, N*H*W); width is the fastest axis.
    x2d = jnp.transpose(x_nchw, (1, 0, 2, 3)).reshape(C, total)

    vmem_limit = _vmem_limit_bytes()
    if block_cols is None:
        bc = _choose_block_cols(total, W, C, Ce, Co, vmem_limit // 2)
    else:
        unit = (W * 128) // math.gcd(W, 128)
        bc = int(min(total, -(-block_cols // unit) * unit))
    grid = (pl.cdiv(total, bc),)

    # Boundary masks for the depthwise taps.  Block starts are multiples of W,
    # so one bc-wide pattern serves every grid step.
    w_local = jnp.arange(bc, dtype=jnp.int32) % W
    masks = jnp.stack([(w_local > 0), (w_local < W - 1)]).astype(jnp.float32)

    # Weights in channels-first orientation; fuse projection + shortcut along K.
    w1 = params["w1"].T                                   # (Ce, C)
    b1 = params["b1"].reshape(Ce, 1)
    dw = params["dw"].T                                   # (Ce, 3)
    bdw = params["bdw"].reshape(Ce, 1)
    if use_shortcut:
        w2 = jnp.concatenate([params["w2"].T, params["ws"].T], axis=1)  # (Co, Ce+C)
        b2 = (params["b2"] + params["bs"]).reshape(Co, 1)
    else:
        w2 = params["w2"].T                               # (Co, Ce)
        b2 = params["b2"].reshape(Co, 1)

    kernel = functools.partial(_vinverted_kernel, use_shortcut, matmul_dtype)

    full = lambda i: (0, 0)
    in_specs = [
        pl.BlockSpec((C, bc), lambda i: (0, i)),
        pl.BlockSpec((2, bc), full),
        pl.BlockSpec((Ce, C), full),
        pl.BlockSpec((Ce, 1), full),
        pl.BlockSpec((Ce, 3), full),
        pl.BlockSpec((Ce, 1), full),
        pl.BlockSpec(w2.shape, full),
        pl.BlockSpec((Co, 1), full),
    ]

    flops = 2 * total * (C * Ce + w2.shape[1] * Co) + 8 * total * Ce
    bytes_accessed = 4 * (total * (C + Co) + masks.size + w1.size + b1.size
                          + dw.size + bdw.size + w2.size + b2.size)

    out2d = pl.pallas_call(
        kernel,
        out_shape=jax.ShapeDtypeStruct((Co, total), jnp.float32),
        grid_spec=pltpu.PrefetchScalarGridSpec(
            num_scalar_prefetch=0,
            grid=grid,
            in_specs=in_specs,
            out_specs=pl.BlockSpec((Co, bc), lambda i: (0, i)),
        ),
        compiler_params=pltpu.CompilerParams(
            dimension_semantics=("parallel",),
            vmem_limit_bytes=vmem_limit),
        cost_estimate=pl.CostEstimate(flops=int(flops), transcendentals=0,
                                      bytes_accessed=int(bytes_accessed)),
    )(x2d, masks, w1, b1, dw, bdw, w2, b2)

    out = out2d.reshape(Co, N, H, W).transpose(1, 0, 2, 3)

    if stride != (1, 1):
        # kernel (1,3), pad (0,1): the strided depthwise conv equals the
        # stride-1 result subsampled, and the final 1x1 conv is pointwise,
        # so subsampling the kernel output is exact.
        sh, sw = stride
        out = out[:, :, ::sh, ::sw]
        # TODO(synk): the strided path recomputes dropped rows/columns inside
        # the kernel (correct, just wasteful for large strides).
    return out


# ----------------------------- pure-JAX reference -----------------------------
def vinverted_reference(x, params, *, in_channel, out_channel, expansion,
                        stride=(1, 1)):
    ce = in_channel * expansion
    dn = ("NCHW", "OIHW", "NCHW")
    prec = lax.Precision.HIGHEST

    w1 = params["w1"].T.reshape(ce, in_channel, 1, 1)
    h = lax.conv_general_dilated(x, w1, (1, 1), ((0, 0), (0, 0)),
                                 dimension_numbers=dn, precision=prec)
    h = h + params["b1"].reshape(1, ce, 1, 1)
    h = jnp.where(h > 0, h, 0.2 * h)

    wd = params["dw"].T.reshape(ce, 1, 1, 3)
    h = lax.conv_general_dilated(h, wd, stride, ((0, 0), (1, 1)),
                                 dimension_numbers=dn, feature_group_count=ce,
                                 precision=prec)
    h = h + params["bdw"].reshape(1, ce, 1, 1)
    h = jnp.where(h > 0, h, 0.2 * h)

    w2 = params["w2"].T.reshape(out_channel, ce, 1, 1)
    out = lax.conv_general_dilated(h, w2, (1, 1), ((0, 0), (0, 0)),
                                   dimension_numbers=dn, precision=prec)
    out = out + params["b2"].reshape(1, out_channel, 1, 1)

    if in_channel != out_channel and stride == (1, 1):
        ws = params["ws"].T.reshape(out_channel, in_channel, 1, 1)
        sc = lax.conv_general_dilated(x, ws, (1, 1), ((0, 0), (0, 0)),
                                      dimension_numbers=dn, precision=prec)
        sc = sc + params["bs"].reshape(1, out_channel, 1, 1)
        out = out + sc
    return out


if __name__ == "__main__":
    def run_case(idx, key, N, C_in, C_out, H, W, expansion, stride,
                 block_cols=None):
        kx, kp = jax.random.split(key)
        x = jax.random.normal(kx, (N, C_in, H, W), jnp.float32)
        use_shortcut = (C_in != C_out) and (stride == (1, 1))
        params = init_params(kp, C_in, C_out, expansion, use_shortcut)

        out = vinverted_block(x, params, in_channel=C_in, out_channel=C_out,
                              expansion=expansion, stride=stride,
                              block_cols=block_cols)
        out = jax.block_until_ready(out)

        ref = vinverted_reference(x, params, in_channel=C_in,
                                  out_channel=C_out, expansion=expansion,
                                  stride=stride)
        assert out.shape == ref.shape, (idx, out.shape, ref.shape)
        err = float(jnp.max(jnp.abs(out - ref)))
        assert jnp.allclose(out, ref, rtol=1e-3, atol=1e-3), (idx, err)

    root = jax.random.PRNGKey(0)
    keys = jax.random.split(root, 4)
    # primary case: shortcut path (fused projection+shortcut matmul)
    run_case(0, keys[0], N=2, C_in=4, C_out=8, H=16, W=16, expansion=4,
             stride=(1, 1))
    # same shapes, multi-step grid with a partial trailing column block
    run_case(1, keys[1], N=2, C_in=4, C_out=8, H=16, W=16, expansion=4,
             stride=(1, 1), block_cols=384)
    # no shortcut, width-strided depthwise conv
    run_case(2, keys[2], N=2, C_in=8, C_out=8, H=8, W=16, expansion=4,
             stride=(1, 2))
    # downsampling in both dims, in != out channels (still no shortcut)
    run_case(3, keys[3], N=1, C_in=4, C_out=6, H=8, W=16, expansion=2,
             stride=(2, 2))

    print("KERNEL_OK")
</pallas_src>

<mosaic_0001>
module attributes {stable_mosaic.version = 11 : i64} {
  func.func @_vinverted_kernel(%arg0: i32, %arg1: memref<4x512xf32, #tpu.memory_space<vmem>>, %arg2: memref<2x512xf32, #tpu.memory_space<vmem>>, %arg3: memref<16x4xf32, #tpu.memory_space<vmem>>, %arg4: memref<16x1xf32, #tpu.memory_space<vmem>>, %arg5: memref<16x3xf32, #tpu.memory_space<vmem>>, %arg6: memref<16x1xf32, #tpu.memory_space<vmem>>, %arg7: memref<8x20xf32, #tpu.memory_space<vmem>>, %arg8: memref<8x1xf32, #tpu.memory_space<vmem>>, %arg9: memref<8x512xf32, #tpu.memory_space<vmem>>) attributes {dimension_semantics = [#tpu.dimension_semantics<parallel>], iteration_bounds = array<i64: 1>, scalar_prefetch = 0 : i64, scratch_operands = 0 : i64, tpu.core_type = #tpu.core_type<tc>, window_params = [{transform_indices = @transform_0, window_bounds = array<i64: 4, 512>}, {pipeline_mode = #tpu.pipeline_mode<synchronous>, transform_indices = @transform_1, window_bounds = array<i64: 2, 512>}, {pipeline_mode = #tpu.pipeline_mode<synchronous>, transform_indices = @transform_2, window_bounds = array<i64: 16, 4>}, {pipeline_mode = #tpu.pipeline_mode<synchronous>, transform_indices = @transform_3, window_bounds = array<i64: 16, 1>}, {pipeline_mode = #tpu.pipeline_mode<synchronous>, transform_indices = @transform_4, window_bounds = array<i64: 16, 3>}, {pipeline_mode = #tpu.pipeline_mode<synchronous>, transform_indices = @transform_5, window_bounds = array<i64: 16, 1>}, {pipeline_mode = #tpu.pipeline_mode<synchronous>, transform_indices = @transform_6, window_bounds = array<i64: 8, 20>}, {pipeline_mode = #tpu.pipeline_mode<synchronous>, transform_indices = @transform_7, window_bounds = array<i64: 8, 1>}, {transform_indices = @transform_8, window_bounds = array<i64: 8, 512>}]} {
    %c0 = arith.constant 0 : index
    %c0_0 = arith.constant 0 : index
    %0 = vector.load %arg1[%c0, %c0_0] : memref<4x512xf32, #tpu.memory_space<vmem>>, vector<4x512xf32>
    %c0_1 = arith.constant 0 : index
    %c0_2 = arith.constant 0 : index
    %1 = vector.load %arg3[%c0_1, %c0_2] : memref<16x4xf32, #tpu.memory_space<vmem>>, vector<16x4xf32>
    %cst = arith.constant dense<0.000000e+00> : vector<16x512xf32>
    %2 = tpu.matmul %1, %0, %cst {dimension_numbers = #tpu.dot_dimension_numbers<[1], [0], [0], [1], [0, 0, 1, 1], [], []>} : vector<16x4xf32>, vector<4x512xf32>, vector<16x512xf32> -> vector<16x512xf32>
    %c0_3 = arith.constant 0 : index
    %c0_4 = arith.constant 0 : index
    %3 = vector.load %arg4[%c0_3, %c0_4] : memref<16x1xf32, #tpu.memory_space<vmem>>, vector<16x1xf32>
    %4 = vector.broadcast %3 : vector<16x1xf32> to vector<16x512xf32>
    %5 = arith.addf %2, %4 : vector<16x512xf32>
    %cst_5 = arith.constant 0.000000e+00 : f32
    %6 = vector.broadcast %cst_5 : f32 to vector<16x512xf32>
    %7 = arith.cmpf ogt, %5, %6 : vector<16x512xf32>
    %cst_6 = arith.constant 2.000000e-01 : f32
    %8 = vector.broadcast %cst_6 : f32 to vector<16x512xf32>
    %9 = arith.mulf %8, %5 : vector<16x512xf32>
    %10 = arith.select %7, %5, %9 : vector<16x512xi1>, vector<16x512xf32>
    %c0_7 = arith.constant 0 : index
    %c0_8 = arith.constant 0 : index
    %11 = vector.load %arg2[%c0_7, %c0_8] : memref<2x512xf32, #tpu.memory_space<vmem>>, vector<1x512xf32>
    %c1 = arith.constant 1 : index
    %c0_9 = arith.constant 0 : index
    %12 = vector.load %arg2[%c1, %c0_9] : memref<2x512xf32, #tpu.memory_space<vmem>>, vector<1x512xf32>
    %cst_10 = arith.constant 0.000000e+00 : f32
    %13 = vector.broadcast %cst_10 : f32 to vector<1x512xf32>
    %14 = arith.cmpf ogt, %11, %13 : vector<1x512xf32>
    %c1_i32 = arith.constant 1 : i32
    %15 = tpu.dynamic_rotate %10 by %c1_i32 dim 1 : vector<16x512xf32>, i32 -> vector<16x512xf32>
    %cst_11 = arith.constant 0.000000e+00 : f32
    %16 = vector.shape_cast %14 : vector<1x512xi1> to vector<1x512xi1>
    %17 = vector.broadcast %16 : vector<1x512xi1> to vector<16x512xi1>
    %18 = vector.broadcast %cst_11 : f32 to vector<16x512xf32>
    %19 = arith.select %17, %15, %18 : vector<16x512xi1>, vector<16x512xf32>
    %cst_12 = arith.constant 0.000000e+00 : f32
    %20 = vector.broadcast %cst_12 : f32 to vector<1x512xf32>
    %21 = arith.cmpf ogt, %12, %20 : vector<1x512xf32>
    %c511_i32 = arith.constant 511 : i32
    %22 = tpu.dynamic_rotate %10 by %c511_i32 dim 1 : vector<16x512xf32>, i32 -> vector<16x512xf32>
    %cst_13 = arith.constant 0.000000e+00 : f32
    %23 = vector.shape_cast %21 : vector<1x512xi1> to vector<1x512xi1>
    %24 = vector.broadcast %23 : vector<1x512xi1> to vector<16x512xi1>
    %25 = vector.broadcast %cst_13 : f32 to vector<16x512xf32>
    %26 = arith.select %24, %22, %25 : vector<16x512xi1>, vector<16x512xf32>
    %c0_14 = arith.constant 0 : index
    %c0_15 = arith.constant 0 : index
    %27 = vector.load %arg5[%c0_14, %c0_15] : memref<16x3xf32, #tpu.memory_space<vmem>>, vector<16x3xf32>
    %28 = vector.extract_strided_slice %27 {offsets = [0, 0], sizes = [16, 1], strides = [1, 1]} : vector<16x3xf32> to vector<16x1xf32>
    %29 = vector.broadcast %28 : vector<16x1xf32> to vector<16x512xf32>
    %30 = arith.mulf %19, %29 : vector<16x512xf32>
    %31 = vector.extract_strided_slice %27 {offsets = [0, 1], sizes = [16, 1], strides = [1, 1]} : vector<16x3xf32> to vector<16x1xf32>
    %32 = vector.broadcast %31 : vector<16x1xf32> to vector<16x512xf32>
    %33 = arith.mulf %10, %32 : vector<16x512xf32>
    %34 = arith.addf %30, %33 : vector<16x512xf32>
    %35 = vector.extract_strided_slice %27 {offsets = [0, 2], sizes = [16, 1], strides = [1, 1]} : vector<16x3xf32> to vector<16x1xf32>
    %36 = vector.broadcast %35 : vector<16x1xf32> to vector<16x512xf32>
    %37 = arith.mulf %26, %36 : vector<16x512xf32>
    %38 = arith.addf %34, %37 : vector<16x512xf32>
    %c0_16 = arith.constant 0 : index
    %c0_17 = arith.constant 0 : index
    %39 = vector.load %arg6[%c0_16, %c0_17] : memref<16x1xf32, #tpu.memory_space<vmem>>, vector<16x1xf32>
    %40 = vector.broadcast %39 : vector<16x1xf32> to vector<16x512xf32>
    %41 = arith.addf %38, %40 : vector<16x512xf32>
    %cst_18 = arith.constant 0.000000e+00 : f32
    %42 = vector.broadcast %cst_18 : f32 to vector<16x512xf32>
    %43 = arith.cmpf ogt, %41, %42 : vector<16x512xf32>
    %cst_19 = arith.constant 2.000000e-01 : f32
    %44 = vector.broadcast %cst_19 : f32 to vector<16x512xf32>
    %45 = arith.mulf %44, %41 : vector<16x512xf32>
    %46 = arith.select %43, %41, %45 : vector<16x512xi1>, vector<16x512xf32>
    %47 = tpu.concatenate %46, %0 in 0 : vector<16x512xf32>, vector<4x512xf32> -> vector<20x512xf32>
    %c0_20 = arith.constant 0 : index
    %c0_21 = arith.constant 0 : index
    %48 = vector.load %arg7[%c0_20, %c0_21] : memref<8x20xf32, #tpu.memory_space<vmem>>, vector<8x20xf32>
    %cst_22 = arith.constant dense<0.000000e+00> : vector<8x512xf32>
    %49 = tpu.matmul %48, %47, %cst_22 {dimension_numbers = #tpu.dot_dimension_numbers<[1], [0], [0], [1], [0, 0, 1, 1], [], []>} : vector<8x20xf32>, vector<20x512xf32>, vector<8x512xf32> -> vector<8x512xf32>
    %c0_23 = arith.constant 0 : index
    %c0_24 = arith.constant 0 : index
    %50 = vector.load %arg8[%c0_23, %c0_24] : memref<8x1xf32, #tpu.memory_space<vmem>>, vector<8x1xf32>
    %51 = vector.broadcast %50 : vector<8x1xf32> to vector<8x512xf32>
    %52 = arith.addf %49, %51 : vector<8x512xf32>
    %c0_25 = arith.constant 0 : index
    %c0_26 = arith.constant 0 : index
    %53 = vector.load %arg9[%c0_25, %c0_26] : memref<8x512xf32, #tpu.memory_space<vmem>>, vector<8x512xf32>
    tpu.vector_store %arg9[%c0_25, %c0_26], %52 {strides = array<i32>} : memref<8x512xf32, #tpu.memory_space<vmem>>, vector<8x512xf32>,
    return
  }
  func.func @transform_0(%arg0: i32) -> (i32, i32) {
    %c0_i32 = arith.constant 0 : i32
    %c0_i32_0 = arith.constant 0 : i32
    return %c0_i32, %arg0 : i32, i32
  }
  func.func @transform_1(%arg0: i32) -> (i32, i32) {
    %c0_i32 = arith.constant 0 : i32
    %c0_i32_0 = arith.constant 0 : i32
    %c0_i32_1 = arith.constant 0 : i32
    return %c0_i32, %c0_i32_0 : i32, i32
  }
  func.func @transform_2(%arg0: i32) -> (i32, i32) {
    %c0_i32 = arith.constant 0 : i32
    %c0_i32_0 = arith.constant 0 : i32
    %c0_i32_1 = arith.constant 0 : i32
    return %c0_i32, %c0_i32_0 : i32, i32
  }
  func.func @transform_3(%arg0: i32) -> (i32, i32) {
    %c0_i32 = arith.constant 0 : i32
    %c0_i32_0 = arith.constant 0 : i32
    %c0_i32_1 = arith.constant 0 : i32
    return %c0_i32, %c0_i32_0 : i32, i32
  }
  func.func @transform_4(%arg0: i32) -> (i32, i32) {
    %c0_i32 = arith.constant 0 : i32
    %c0_i32_0 = arith.constant 0 : i32
    %c0_i32_1 = arith.constant 0 : i32
    return %c0_i32, %c0_i32_0 : i32, i32
  }
  func.func @transform_5(%arg0: i32) -> (i32, i32) {
    %c0_i32 = arith.constant 0 : i32
    %c0_i32_0 = arith.constant 0 : i32
    %c0_i32_1 = arith.constant 0 : i32
    return %c0_i32, %c0_i32_0 : i32, i32
  }
  func.func @transform_6(%arg0: i32) -> (i32, i32) {
    %c0_i32 = arith.constant 0 : i32
    %c0_i32_0 = arith.constant 0 : i32
    %c0_i32_1 = arith.constant 0 : i32
    return %c0_i32, %c0_i32_0 : i32, i32
  }
  func.func @transform_7(%arg0: i32) -> (i32, i32) {
    %c0_i32 = arith.constant 0 : i32
    %c0_i32_0 = arith.constant 0 : i32
    %c0_i32_1 = arith.constant 0 : i32
    return %c0_i32, %c0_i32_0 : i32, i32
  }
  func.func @transform_8(%arg0: i32) -> (i32, i32) {
    %c0_i32 = arith.constant 0 : i32
    %c0_i32_0 = arith.constant 0 : i32
    return %c0_i32, %arg0 : i32, i32
  }
}

</mosaic_0001>

<llo_original>
// kernel: tpu_custom_call.1
$region0: #{tpu_custom_call.1}
  #allocation0 [shape = 'u32[]', space=smem, size = 0x4, offset = 0x4, fixed_abs, tag = 'smem constant byte address 0x4 - core index']
  #allocation1 [shape = 'u32[144,128]{1,0:T(1,128)}', space=vmem, size = 0x12000, scoped, tag = 'internal scratch']
  %s0 = inlined_call_operand.vmem [shape: f32[4,512], index: 0, kind: input, shape index: {}]
  %s1 = inlined_call_operand.vmem [shape: f32[2,512], index: 1, kind: input, shape index: {}]
  %s2 = inlined_call_operand.vmem [shape: f32[16,4], index: 2, kind: input, shape index: {}]
  %s3 = inlined_call_operand.vmem [shape: f32[16,1], index: 3, kind: input, shape index: {}]
  %s4 = inlined_call_operand.vmem [shape: f32[16,3], index: 4, kind: input, shape index: {}]
  %s5 = inlined_call_operand.vmem [shape: f32[16,1], index: 5, kind: input, shape index: {}]
  %s6 = inlined_call_operand.vmem [shape: f32[8,20], index: 6, kind: input, shape index: {}]
  %s7 = inlined_call_operand.vmem [shape: f32[8,1], index: 7, kind: input, shape index: {}]
  %s8 = inlined_call_operand.hbm [shape: f32[8,512], index: 8, kind: output, shape index: {}]
  %s9 = sld [smem:[#allocation0]]
  $region42: #{tpu_custom_call.1} parent=0
    _
  %s11 = ssub.s32 1, %s9
  %s12 = scalar_select 0, %s11, %s9
  $region1: #{tpu_custom_call.1} parent=0
    #allocation2 [shape = 'u8[16384]{0}', space=vmem, size = 0x4000, scoped, tag = 'output window, operand 0, single buffered']
    #allocation3 [shape = 's32[1]{0}', space=sflag, size = 0x4, scoped, tag = 'scoped memory for tpu_custom_call.1']
    %13 = vsyncpa [#allocation3], 0
    // Predicated region
    $region2: #{tpu_custom_call.1} parent=1 // pred_check
      _
    $region3: #{tpu_custom_call.1} parent=1 // pred_check_branch
      %15 = sbr.rel (0) target = $region5
    $region4: #{tpu_custom_call.1} parent=1 // pred_region
      _
    $region5: #{tpu_custom_call.1} parent=1 // pred_fallthru
      _
    // Predicated region
    $region6: #{tpu_custom_call.1} parent=1 // pred_check
      _
    $region7: #{tpu_custom_call.1} parent=1 // pred_check_branch
      %17 = sbr.rel (0) target = $region9
    $region8: #{tpu_custom_call.1} parent=1 // pred_region
      _
    $region9: #{tpu_custom_call.1} parent=1 // pred_fallthru
      _
    // Predicated region
    $region10: #{tpu_custom_call.1} parent=1 // pred_check
      _
    $region11: #{tpu_custom_call.1} parent=1 // pred_check_branch
      %19 = sbr.rel (0) target = $region13
    $region12: #{tpu_custom_call.1} parent=1 // pred_region
      _
    $region13: #{tpu_custom_call.1} parent=1 // pred_fallthru
      _
    // Predicated region
    $region14: #{tpu_custom_call.1} parent=1 // pred_check
      _
    $region15: #{tpu_custom_call.1} parent=1 // pred_check_branch
      %21 = sbr.rel (0) target = $region17
    $region16: #{tpu_custom_call.1} parent=1 // pred_region
      _
    $region17: #{tpu_custom_call.1} parent=1 // pred_fallthru
      _
    // Predicated region
    $region18: #{tpu_custom_call.1} parent=1 // pred_check
      _
    $region19: #{tpu_custom_call.1} parent=1 // pred_check_branch
      %23 = sbr.rel (0) target = $region21
    $region20: #{tpu_custom_call.1} parent=1 // pred_region
      _
    $region21: #{tpu_custom_call.1} parent=1 // pred_fallthru
      _
    // Predicated region
    $region22: #{tpu_custom_call.1} parent=1 // pred_check
      _
    $region23: #{tpu_custom_call.1} parent=1 // pred_check_branch
      %25 = sbr.rel (0) target = $region25
    $region24: #{tpu_custom_call.1} parent=1 // pred_region
      _
    $region25: #{tpu_custom_call.1} parent=1 // pred_fallthru
      _
    // Predicated region
    $region26: #{tpu_custom_call.1} parent=1 // pred_check
      _
    $region27: #{tpu_custom_call.1} parent=1 // pred_check_branch
      %27 = sbr.rel (0) target = $region29
    $region28: #{tpu_custom_call.1} parent=1 // pred_region
      _
    $region29: #{tpu_custom_call.1} parent=1 // pred_fallthru
      _
    // Predicated region
    $region30: #{tpu_custom_call.1} parent=1 // pred_check
      _
    $region31: #{tpu_custom_call.1} parent=1 // pred_check_branch
      %29 = sbr.rel (0) target = $region33
    $region32: #{tpu_custom_call.1} parent=1 // pred_region
      _
    $region33: #{tpu_custom_call.1} parent=1 // pred_fallthru
      _
    %v30 = vld [vmem:[%s0] sm:$0xff]
    %v31 = vld [vmem:[%s0 + $0x8] sm:$0xff]
    %v32 = vld [vmem:[%s2] sm:$0xff]
    %v33 = vld [vmem:[%s2 + $0x8] sm:$0xff]
    %v34 = vld [vmem:[%s3] sm:$0xff]
    %v35 = vld [vmem:[%s3 + $0x8] sm:$0xff]
    %37 = vset.pattern.permute.xlu0 0
    %38 = vperm.xlu0 %37, %v34
    %v39 = vpop.permute.xlu0 %38
    %42 = vset.pattern.permute.xlu0 0
    %43 = vperm.xlu0 %42, %v35
    %v44 = vpop.permute.xlu0 %43
    %v48 = vcombine.high %v30, %v30
    %v49 = vcombine.high %v31, %v31
    %vm50 = vcmask 31744
    %v52 = vsel %vm50, %v32, 0
    %v55 = vsel %vm50, %v33, 0
    %vm57 = vcmask 1043456
    %v58 = vsel %vm57, %v30, 0
    %v60 = vsel %vm57, %v48, 0
    %v62 = vsel %vm57, %v31, 0
    %v64 = vsel %vm57, %v49, 0
    %66 = vmatprep.subr.mxu0 %v60
    %67 = vmatpush1.msra.mxu0 %v58
    %68 = vmatprep.subr.mxu0 0.0
    %69 = vmatpush1.msra.mxu0 0.0
    %70 = vmatprep.subr.mxu0 0.0
    %71 = vmatpush1.msra.mxu0 0.0
    %72 = vmatprep.subr.mxu0 0.0
    %73 = vmatpush1.msra.mxu0 0.0
    %74 = vmatprep.subr.mxu0 0.0
    %75 = vmatpush1.msra.mxu0 0.0
    %76 = vmatprep.subr.mxu0 0.0
    %77 = vmatpush1.msra.mxu0 0.0
    %78 = vmatprep.subr.mxu0 0.0
    %79 = vmatpush1.msra.mxu0 0.0
    %80 = vmatprep.subr.mxu0 0.0
    %81 = vmatpush1.msra.mxu0 0.0
    %82 = vmatprep.subr.mxu0 0.0
    %83 = vmatpush1.msra.mxu0 0.0
    %84 = vmatprep.subr.mxu0 0.0
    %85 = vmatpush1.msra.mxu0 0.0
    %86 = vmatprep.subr.mxu0 0.0
    %87 = vmatpush1.msra.mxu0 0.0
    %88 = vmatprep.subr.mxu0 0.0
    %89 = vmatpush1.msra.mxu0 0.0
    %90 = vmatprep.subr.mxu0 0.0
    %91 = vmatpush1.msra.mxu0 0.0
    %92 = vmatprep.subr.mxu0 0.0
    %93 = vmatpush1.msra.mxu0 0.0
    %94 = vmatprep.subr.mxu0 0.0
    %95 = vmatpush1.msra.mxu0 0.0
    %96 = vmatprep.subr.mxu0 0.0
    %97 = vmatpush1.msra.mxu0 0.0
    %98 = vmatprep.subr.mxu0 0.0
    %99 = vmatpush1.msra.mxu0 0.0
    %100 = vmatprep.subr.mxu0 0.0
    %101 = vmatpush1.msra.mxu0 0.0
    %102 = vmatprep.subr.mxu0 0.0
    %103 = vmatpush1.msra.mxu0 0.0
    %104 = vmatprep.subr.mxu0 0.0
    %105 = vmatpush1.msra.mxu0 0.0
    %106 = vmatprep.subr.mxu0 0.0
    %107 = vmatpush1.msra.mxu0 0.0
    %108 = vmatprep.subr.mxu0 0.0
    %109 = vmatpush1.msra.mxu0 0.0
    %110 = vmatprep.subr.mxu0 0.0
    %111 = vmatpush1.msra.mxu0 0.0
    %112 = vmatprep.subr.mxu0 0.0
    %113 = vmatpush1.msra.mxu0 0.0
    %114 = vmatprep.subr.mxu0 0.0
    %115 = vmatpush1.msra.mxu0 0.0
    %116 = vmatprep.subr.mxu0 0.0
    %117 = vmatpush1.msra.mxu0 0.0
    %118 = vmatprep.subr.mxu0 0.0
    %119 = vmatpush1.msra.mxu0 0.0
    %120 = vmatprep.subr.mxu0 0.0
    %121 = vmatpush1.msra.mxu0 0.0
    %122 = vmatprep.subr.mxu0 0.0
    %123 = vmatpush1.msra.mxu0 0.0
    %124 = vmatprep.subr.mxu0 0.0
    %125 = vmatpush1.msra.mxu0 0.0
    %126 = vmatprep.subr.mxu0 0.0
    %127 = vmatpush1.msra.mxu0 0.0
    %128 = vmatprep.subr.mxu0 0.0
    %129 = vmatpush1.msra.mxu0 0.0
    %130 = vmatprep.mubr.f32.mxu0 0.0
    %131 = vmatmul.mubr.f32.gmra.mrb[0].mxu0 %v52
    %v132 = vpop.f32.mrb[0].mxu0
    %v133 = vadd.f32 %v39, %v132
    %v134 = vpop.f32.mrb[0].mxu0
    %v135 = vadd.f32 %v39, %v134
    %136 = vmatprep.mubr.f32.mxu0 0.0
    %137 = vmatmul.mubr.f32.gmra.mrb[0].mxu0 %v55
    %v138 = vpop.f32.mrb[0].mxu0
    %v139 = vadd.f32 %v44, %v138
    %v140 = vpop.f32.mrb[0].mxu0
    %v141 = vadd.f32 %v44, %v140
    %142 = vdwg.mxu0
    %143 = vmatprep.subr.mxu0 %v64
    %144 = vmatpush1.msra.mxu0 %v62
    %145 = vmatprep.subr.mxu0 0.0
    %146 = vmatpush1.msra.mxu0 0.0
    %147 = vmatprep.subr.mxu0 0.0
    %148 = vmatpush1.msra.mxu0 0.0
    %149 = vmatprep.subr.mxu0 0.0
    %150 = vmatpush1.msra.mxu0 0.0
    %151 = vmatprep.subr.mxu0 0.0
    %152 = vmatpush1.msra.mxu0 0.0
    %153 = vmatprep.subr.mxu0 0.0
    %154 = vmatpush1.msra.mxu0 0.0
    %155 = vmatprep.subr.mxu0 0.0
    %156 = vmatpush1.msra.mxu0 0.0
    %157 = vmatprep.subr.mxu0 0.0
    %158 = vmatpush1.msra.mxu0 0.0
    %159 = vmatprep.subr.mxu0 0.0
    %160 = vmatpush1.msra.mxu0 0.0
    %161 = vmatprep.subr.mxu0 0.0
    %162 = vmatpush1.msra.mxu0 0.0
    %163 = vmatprep.subr.mxu0 0.0
    %164 = vmatpush1.msra.mxu0 0.0
    %165 = vmatprep.subr.mxu0 0.0
    %166 = vmatpush1.msra.mxu0 0.0
    %167 = vmatprep.subr.mxu0 0.0
    %168 = vmatpush1.msra.mxu0 0.0
    %169 = vmatprep.subr.mxu0 0.0
    %170 = vmatpush1.msra.mxu0 0.0
    %171 = vmatprep.subr.mxu0 0.0
    %172 = vmatpush1.msra.mxu0 0.0
    %173 = vmatprep.subr.mxu0 0.0
    %174 = vmatpush1.msra.mxu0 0.0
    %175 = vmatprep.subr.mxu0 0.0
    %176 = vmatpush1.msra.mxu0 0.0
    %177 = vmatprep.subr.mxu0 0.0
    %178 = vmatpush1.msra.mxu0 0.0
    %179 = vmatprep.subr.mxu0 0.0
    %180 = vmatpush1.msra.mxu0 0.0
    %181 = vmatprep.subr.mxu0 0.0
    %182 = vmatpush1.msra.mxu0 0.0
    %183 = vmatprep.subr.mxu0 0.0
    %184 = vmatpush1.msra.mxu0 0.0
    %185 = vmatprep.subr.mxu0 0.0
    %186 = vmatpush1.msra.mxu0 0.0
    %187 = vmatprep.subr.mxu0 0.0
    %188 = vmatpush1.msra.mxu0 0.0
    %189 = vmatprep.subr.mxu0 0.0
    %190 = vmatpush1.msra.mxu0 0.0
    %191 = vmatprep.subr.mxu0 0.0
    %192 = vmatpush1.msra.mxu0 0.0
    %193 = vmatprep.subr.mxu0 0.0
    %194 = vmatpush1.msra.mxu0 0.0
    %195 = vmatprep.subr.mxu0 0.0
    %196 = vmatpush1.msra.mxu0 0.0
    %197 = vmatprep.subr.mxu0 0.0
    %198 = vmatpush1.msra.mxu0 0.0
    %199 = vmatprep.subr.mxu0 0.0
    %200 = vmatpush1.msra.mxu0 0.0
    %201 = vmatprep.subr.mxu0 0.0
    %202 = vmatpush1.msra.mxu0 0.0
    %203 = vmatprep.subr.mxu0 0.0
    %204 = vmatpush1.msra.mxu0 0.0
    %205 = vmatprep.subr.mxu0 0.0
    %206 = vmatpush1.msra.mxu0 0.0
    %207 = vmatprep.mubr.f32.mxu0 0.0
    %208 = vmatmul.mubr.f32.gmra.mrb[0].mxu0 %v52
    %v209 = vpop.f32.mrb[0].mxu0
    %v210 = vadd.f32 %v39, %v209
    %v211 = vpop.f32.mrb[0].mxu0
    %v212 = vadd.f32 %v39, %v211
    %213 = vmatprep.mubr.f32.mxu0 0.0
    %214 = vmatmul.mubr.f32.gmra.mrb[0].mxu0 %v55
    %v215 = vpop.f32.mrb[0].mxu0
    %v216 = vadd.f32 %v44, %v215
    %v217 = vpop.f32.mrb[0].mxu0
    %v218 = vadd.f32 %v44, %v217
    %219 = vdwg.mxu0
    %vm220 = vcmp.gt.f32.partialorder %v133, 0.0
    %vm221 = vcmp.gt.f32.partialorder %v135, 0.0
    %vm222 = vcmp.gt.f32.partialorder %v210, 0.0
    %vm223 = vcmp.gt.f32.partialorder %v212, 0.0
    %vm224 = vcmp.gt.f32.partialorder %v139, 0.0
    %vm225 = vcmp.gt.f32.partialorder %v141, 0.0
    %vm226 = vcmp.gt.f32.partialorder %v216, 0.0
    %vm227 = vcmp.gt.f32.partialorder %v218, 0.0
    %v228 = vmul.f32 %v133, 0.2
    %v229 = vmul.f32 %v135, 0.2
    %v230 = vmul.f32 %v210, 0.2
    %v231 = vmul.f32 %v212, 0.2
    %v232 = vmul.f32 %v139, 0.2
    %v233 = vmul.f32 %v141, 0.2
    %v234 = vmul.f32 %v216, 0.2
    %v235 = vmul.f32 %v218, 0.2
    %v236 = vsel %vm220, %v133, %v228
    %v237 = vsel %vm221, %v135, %v229
    %v238 = vsel %vm222, %v210, %v230
    %v239 = vsel %vm223, %v212, %v231
    %v240 = vsel %vm224, %v139, %v232
    %v241 = vsel %vm225, %v141, %v233
    %v242 = vsel %vm226, %v216, %v234
    %v243 = vsel %vm227, %v218, %v235
    %v244 = vld [vmem:[%s1] ss:$2 sm:$0xf]
    %s245 = scalar_lea.vmem %s1, 1
    %v246 = vld [vmem:[%s245] ss:$2 sm:$0xf]
    %vm247 = vcmp.gt.f32.partialorder %v244, 0.0
    %248 = vrot.lane.b32.xlu0 %v236, 1
    %v249 = vpop.permute.xlu0 %248
    %250 = vrot.lane.b32.xlu0 %v240, 1
    %v251 = vpop.permute.xlu0 %250
    %252 = vrot.lane.b32.xlu0 %v237, 1
    %v253 = vpop.permute.xlu0 %252
    %254 = vrot.lane.b32.xlu0 %v241, 1
    %v255 = vpop.permute.xlu0 %254
    %256 = vrot.lane.b32.xlu0 %v238, 1
    %v257 = vpop.permute.xlu0 %256
    %258 = vrot.lane.b32.xlu0 %v242, 1
    %v259 = vpop.permute.xlu0 %258
    %260 = vrot.lane.b32.xlu0 %v239, 1
    %v261 = vpop.permute.xlu0 %260
    %262 = vrot.lane.b32.xlu0 %v243, 1
    %v263 = vpop.permute.xlu0 %262
    %v264 = vlaneseq
    %v265 = vand.u32 %v264, 127
    %vm266 = vcmp.lt.s32.totalorder %v265, 1
    %v267 = vsel %vm266, %v257, %v261
    %v268 = vsel %vm266, %v259, %v263
    %v269 = vsel %vm266, %v253, %v257
    %v270 = vsel %vm266, %v255, %v259
    %v271 = vsel %vm266, %v249, %v253
    %v272 = vsel %vm266, %v251, %v255
    %v273 = vsel %vm266, %v261, %v249
    %v274 = vsel %vm266, %v263, %v251
    %v275 = vsel %vm247, 1, 0
    %v276 = vlaneseq
    %v277 = vshrl.u32 %v276, 7
    %v278 = vsub.s32 0, %v277
    %v279 = vrot.slane %v275, %v278
    %v280 = vlaneseq
    %v281 = vshrl.u32 %v280, 7
    %v282 = vsub.s32 1, %v281
    %v283 = vrot.slane %v275, %v282
    %v284 = vlaneseq
    %v285 = vshrl.u32 %v284, 7
    %v286 = vsub.s32 2, %v285
    %v287 = vrot.slane %v275, %v286
    %v288 = vlaneseq
    %v289 = vshrl.u32 %v288, 7
    %v290 = vsub.s32 3, %v289
    %v291 = vrot.slane %v275, %v290
    %vm292 = vcmp.eq.s32.totalorder %v279, 1
    %vm293 = vcmp.eq.s32.totalorder %v283, 1
    %vm294 = vcmp.eq.s32.totalorder %v287, 1
    %vm295 = vcmp.eq.s32.totalorder %v291, 1
    %v296 = vsel %vm292, %v273, 0.0
    %v297 = vsel %vm293, %v271, 0.0
    %v298 = vsel %vm294, %v269, 0.0
    %v299 = vsel %vm295, %v267, 0.0
    %v300 = vsel %vm292, %v274, 0.0
    %v301 = vsel %vm293, %v272, 0.0
    %v302 = vsel %vm294, %v270, 0.0
    %v303 = vsel %vm295, %v268, 0.0
    %vm304 = vcmp.gt.f32.partialorder %v246, 0.0
    %305 = vrot.lane.b32.xlu0 %v236, 127
    %v306 = vpop.permute.xlu0 %305
    %307 = vrot.lane.b32.xlu0 %v240, 127
    %v308 = vpop.permute.xlu0 %307
    %309 = vrot.lane.b32.xlu0 %v237, 127
    %v310 = vpop.permute.xlu0 %309
    %311 = vrot.lane.b32.xlu0 %v241, 127
    %v312 = vpop.permute.xlu0 %311
    %313 = vrot.lane.b32.xlu0 %v238, 127
    %v314 = vpop.permute.xlu0 %313
    %315 = vrot.lane.b32.xlu0 %v242, 127
    %v316 = vpop.permute.xlu0 %315
    %317 = vrot.lane.b32.xlu0 %v239, 127
    %v318 = vpop.permute.xlu0 %317
    %319 = vrot.lane.b32.xlu0 %v243, 127
    %v320 = vpop.permute.xlu0 %319
    %vm321 = vcmp.lt.s32.totalorder %v265, 127
    %v322 = vsel %vm321, %v314, %v318
    %v323 = vsel %vm321, %v316, %v320
    %v324 = vsel %vm321, %v310, %v314
    %v325 = vsel %vm321, %v312, %v316
    %v326 = vsel %vm321, %v306, %v310
    %v327 = vsel %vm321, %v308, %v312
    %v328 = vsel %vm321, %v318, %v306
    %v329 = vsel %vm321, %v320, %v308
    %v330 = vsel %vm304, 1, 0
    %v331 = vlaneseq
    %v332 = vshrl.u32 %v331, 7
    %v333 = vsub.s32 0, %v332
    %v334 = vrot.slane %v330, %v333
    %v335 = vlaneseq
    %v336 = vshrl.u32 %v335, 7
    %v337 = vsub.s32 1, %v336
    %v338 = vrot.slane %v330, %v337
    %v339 = vlaneseq
    %v340 = vshrl.u32 %v339, 7
    %v341 = vsub.s32 2, %v340
    %v342 = vrot.slane %v330, %v341
    %v343 = vlaneseq
    %v344 = vshrl.u32 %v343, 7
    %v345 = vsub.s32 3, %v344
    %v346 = vrot.slane %v330, %v345
    %vm347 = vcmp.eq.s32.totalorder %v334, 1
    %vm348 = vcmp.eq.s32.totalorder %v338, 1
    %vm349 = vcmp.eq.s32.totalorder %v342, 1
    %vm350 = vcmp.eq.s32.totalorder %v346, 1
    %v351 = vsel %vm347, %v326, 0.0
    %v352 = vsel %vm348, %v324, 0.0
    %v353 = vsel %vm349, %v322, 0.0
    %v354 = vsel %vm350, %v328, 0.0
    %v355 = vsel %vm347, %v327, 0.0
    %v356 = vsel %vm348, %v325, 0.0
    %v357 = vsel %vm349, %v323, 0.0
    %v358 = vsel %vm350, %v329, 0.0
    %v359 = vld [vmem:[%s4] sm:$0xff]
    %v360 = vld [vmem:[%s4 + $0x8] sm:$0xff]
    %362 = vset.pattern.permute.xlu0 0
    %363 = vperm.xlu0 %362, %v359
    %v364 = vpop.permute.xlu0 %363
    %367 = vset.pattern.permute.xlu0 0
    %368 = vperm.xlu0 %367, %v360
    %v369 = vpop.permute.xlu0 %368
    %v371 = vmul.f32 %v296, %v364
    %v372 = vmul.f32 %v297, %v364
    %v373 = vmul.f32 %v298, %v364
    %v374 = vmul.f32 %v299, %v364
    %v375 = vmul.f32 %v300, %v369
    %v376 = vmul.f32 %v301, %v369
    %v377 = vmul.f32 %v302, %v369
    %v378 = vmul.f32 %v303, %v369
    %379 = vset.pattern.permute.xlu0 1
    %380 = vperm.xlu0 %379, %v359
    %v381 = vpop.permute.xlu0 %380
    %383 = vset.pattern.permute.xlu0 1
    %384 = vperm.xlu0 %383, %v360
    %v385 = vpop.permute.xlu0 %384
    %v387 = vmul.f32 %v236, %v381
    %v388 = vmul.f32 %v237, %v381
    %v389 = vmul.f32 %v238, %v381
    %v390 = vmul.f32 %v239, %v381
    %v391 = vmul.f32 %v240, %v385
    %v392 = vmul.f32 %v241, %v385
    %v393 = vmul.f32 %v242, %v385
    %v394 = vmul.f32 %v243, %v385
    %v395 = vadd.f32 %v371, %v387
    %v396 = vadd.f32 %v372, %v388
    %v397 = vadd.f32 %v373, %v389
    %v398 = vadd.f32 %v374, %v390
    %v399 = vadd.f32 %v375, %v391
    %v400 = vadd.f32 %v376, %v392
    %v401 = vadd.f32 %v377, %v393
    %v402 = vadd.f32 %v378, %v394
    %403 = vset.pattern.permute.xlu0 2
    %404 = vperm.xlu0 %403, %v359
    %v405 = vpop.permute.xlu0 %404
    %407 = vset.pattern.permute.xlu0 2
    %408 = vperm.xlu0 %407, %v360
    %v409 = vpop.permute.xlu0 %408
    %v411 = vmul.f32 %v351, %v405
    %v412 = vmul.f32 %v352, %v405
    %v413 = vmul.f32 %v353, %v405
    %v414 = vmul.f32 %v354, %v405
    %v415 = vmul.f32 %v355, %v409
    %v416 = vmul.f32 %v356, %v409
    %v417 = vmul.f32 %v357, %v409
    %v418 = vmul.f32 %v358, %v409
    %v419 = vadd.f32 %v395, %v411
    %v420 = vadd.f32 %v396, %v412
    %v421 = vadd.f32 %v397, %v413
    %v422 = vadd.f32 %v398, %v414
    %v423 = vadd.f32 %v399, %v415
    %v424 = vadd.f32 %v400, %v416
    %v425 = vadd.f32 %v401, %v417
    %v426 = vadd.f32 %v402, %v418
    %v427 = vld [vmem:[%s5] sm:$0xff]
    %v428 = vld [vmem:[%s5 + $0x8] sm:$0xff]
    %430 = vset.pattern.permute.xlu0 0
    %431 = vperm.xlu0 %430, %v427
    %v432 = vpop.permute.xlu0 %431
    %435 = vset.pattern.permute.xlu0 0
    %436 = vperm.xlu0 %435, %v428
    %v437 = vpop.permute.xlu0 %436
    %v439 = vadd.f32 %v419, %v432
    %v440 = vadd.f32 %v420, %v432
    %v441 = vadd.f32 %v421, %v432
    %v442 = vadd.f32 %v422, %v432
    %v443 = vadd.f32 %v423, %v437
    %v444 = vadd.f32 %v424, %v437
    %v445 = vadd.f32 %v425, %v437
    %v446 = vadd.f32 %v426, %v437
    %vm447 = vcmp.gt.f32.partialorder %v439, 0.0
    %vm448 = vcmp.gt.f32.partialorder %v440, 0.0
    %vm449 = vcmp.gt.f32.partialorder %v441, 0.0
    %vm450 = vcmp.gt.f32.partialorder %v442, 0.0
    %vm451 = vcmp.gt.f32.partialorder %v443, 0.0
    %vm452 = vcmp.gt.f32.partialorder %v444, 0.0
    %vm453 = vcmp.gt.f32.partialorder %v445, 0.0
    %vm454 = vcmp.gt.f32.partialorder %v446, 0.0
    %v455 = vmul.f32 %v439, 0.2
    %v456 = vmul.f32 %v440, 0.2
    %v457 = vmul.f32 %v441, 0.2
    %v458 = vmul.f32 %v442, 0.2
    %v459 = vmul.f32 %v443, 0.2
    %v460 = vmul.f32 %v444, 0.2
    %v461 = vmul.f32 %v445, 0.2
    %v462 = vmul.f32 %v446, 0.2
    %v463 = vsel %vm447, %v439, %v455
    %v464 = vsel %vm448, %v440, %v456
    %v465 = vsel %vm449, %v441, %v457
    %v466 = vsel %vm450, %v442, %v458
    %v467 = vsel %vm451, %v443, %v459
    %v468 = vsel %vm452, %v444, %v460
    %v469 = vsel %vm453, %v445, %v461
    %v470 = vsel %vm454, %v446, %v462
    %v471 = vld [vmem:[%s6] sm:$0xff]
    %v472 = vld [vmem:[%s7] sm:$0xff]
    %474 = vset.pattern.permute.xlu0 0
    %475 = vperm.xlu0 %474, %v472
    %v476 = vpop.permute.xlu0 %475
    %vm478 = vcmask 162816
    %v480 = vsel %vm478, %v471, 0
    %482 = vmatprep.subr.mxu0 %v464
    %483 = vmatpush1.msra.mxu0 %v463
    %484 = vmatprep.subr.mxu0 %v468
    %485 = vmatpush1.msra.mxu0 %v467
    %486 = vmatprep.subr.mxu0 %v60
    %487 = vmatpush1.msra.mxu0 %v58
    %488 = vmatprep.subr.mxu0 0.0
    %489 = vmatpush1.msra.mxu0 0.0
    %490 = vmatprep.subr.mxu0 0.0
    %491 = vmatpush1.msra.mxu0 0.0
    %492 = vmatprep.subr.mxu0 0.0
    %493 = vmatpush1.msra.mxu0 0.0
    %494 = vmatprep.subr.mxu0 0.0
    %495 = vmatpush1.msra.mxu0 0.0
    %496 = vmatprep.subr.mxu0 0.0
    %497 = vmatpush1.msra.mxu0 0.0
    %498 = vmatprep.subr.mxu0 0.0
    %499 = vmatpush1.msra.mxu0 0.0
    %500 = vmatprep.subr.mxu0 0.0
    %501 = vmatpush1.msra.mxu0 0.0
    %502 = vmatprep.subr.mxu0 0.0
    %503 = vmatpush1.msra.mxu0 0.0
    %504 = vmatprep.subr.mxu0 0.0
    %505 = vmatpush1.msra.mxu0 0.0
    %506 = vmatprep.subr.mxu0 0.0
    %507 = vmatpush1.msra.mxu0 0.0
    %508 = vmatprep.subr.mxu0 0.0
    %509 = vmatpush1.msra.mxu0 0.0
    %510 = vmatprep.subr.mxu0 0.0
    %511 = vmatpush1.msra.mxu0 0.0
    %512 = vmatprep.subr.mxu0 0.0
    %513 = vmatpush1.msra.mxu0 0.0
    %514 = vmatprep.subr.mxu0 0.0
    %515 = vmatpush1.msra.mxu0 0.0
    %516 = vmatprep.subr.mxu0 0.0
    %517 = vmatpush1.msra.mxu0 0.0
    %518 = vmatprep.subr.mxu0 0.0
    %519 = vmatpush1.msra.mxu0 0.0
    %520 = vmatprep.subr.mxu0 0.0
    %521 = vmatpush1.msra.mxu0 0.0
    %522 = vmatprep.subr.mxu0 0.0
    %523 = vmatpush1.msra.mxu0 0.0
    %524 = vmatprep.subr.mxu0 0.0
    %525 = vmatpush1.msra.mxu0 0.0
    %526 = vmatprep.subr.mxu0 0.0
    %527 = vmatpush1.msra.mxu0 0.0
    %528 = vmatprep.subr.mxu0 0.0
    %529 = vmatpush1.msra.mxu0 0.0
    %530 = vmatprep.subr.mxu0 0.0
    %531 = vmatpush1.msra.mxu0 0.0
    %532 = vmatprep.subr.mxu0 0.0
    %533 = vmatpush1.msra.mxu0 0.0
    %534 = vmatprep.subr.mxu0 0.0
    %535 = vmatpush1.msra.mxu0 0.0
    %536 = vmatprep.subr.mxu0 0.0
    %537 = vmatpush1.msra.mxu0 0.0
    %538 = vmatprep.subr.mxu0 0.0
    %539 = vmatpush1.msra.mxu0 0.0
    %540 = vmatprep.subr.mxu0 0.0
    %541 = vmatpush1.msra.mxu0 0.0
    %542 = vmatprep.subr.mxu0 0.0
    %543 = vmatpush1.msra.mxu0 0.0
    %544 = vmatprep.subr.mxu0 0.0
    %545 = vmatpush1.msra.mxu0 0.0
    %546 = vmatprep.mubr.f32.mxu0 0.0
    %547 = vmatmul.mubr.f32.gmra.mrb[0].mxu0 %v480
    %v548 = vpop.f32.mrb[0].mxu0
    %v549 = vadd.f32 %v476, %v548
    %v550 = vpop.f32.mrb[0].mxu0
    %v551 = vadd.f32 %v476, %v550
    %552 = vdwg.mxu0
    %553 = vmatprep.subr.mxu0 %v466
    %554 = vmatpush1.msra.mxu0 %v465
    %555 = vmatprep.subr.mxu0 %v470
    %556 = vmatpush1.msra.mxu0 %v469
    %557 = vmatprep.subr.mxu0 %v64
    %558 = vmatpush1.msra.mxu0 %v62
    %559 = vmatprep.subr.mxu0 0.0
    %560 = vmatpush1.msra.mxu0 0.0
    %561 = vmatprep.subr.mxu0 0.0
    %562 = vmatpush1.msra.mxu0 0.0
    %563 = vmatprep.subr.mxu0 0.0
    %564 = vmatpush1.msra.mxu0 0.0
    %565 = vmatprep.subr.mxu0 0.0
    %566 = vmatpush1.msra.mxu0 0.0
    %567 = vmatprep.subr.mxu0 0.0
    %568 = vmatpush1.msra.mxu0 0.0
    %569 = vmatprep.subr.mxu0 0.0
    %570 = vmatpush1.msra.mxu0 0.0
    %571 = vmatprep.subr.mxu0 0.0
    %572 = vmatpush1.msra.mxu0 0.0
    %573 = vmatprep.subr.mxu0 0.0
    %574 = vmatpush1.msra.mxu0 0.0
    %575 = vmatprep.subr.mxu0 0.0
    %576 = vmatpush1.msra.mxu0 0.0
    %577 = vmatprep.subr.mxu0 0.0
    %578 = vmatpush1.msra.mxu0 0.0
    %579 = vmatprep.subr.mxu0 0.0
    %580 = vmatpush1.msra.mxu0 0.0
    %581 = vmatprep.subr.mxu0 0.0
    %582 = vmatpush1.msra.mxu0 0.0
    %583 = vmatprep.subr.mxu0 0.0
    %584 = vmatpush1.msra.mxu0 0.0
    %585 = vmatprep.subr.mxu0 0.0
    %586 = vmatpush1.msra.mxu0 0.0
    %587 = vmatprep.subr.mxu0 0.0
    %588 = vmatpush1.msra.mxu0 0.0
    %589 = vmatprep.subr.mxu0 0.0
    %590 = vmatpush1.msra.mxu0 0.0
    %591 = vmatprep.subr.mxu0 0.0
    %592 = vmatpush1.msra.mxu0 0.0
    %593 = vmatprep.subr.mxu0 0.0
    %594 = vmatpush1.msra.mxu0 0.0
    %595 = vmatprep.subr.mxu0 0.0
    %596 = vmatpush1.msra.mxu0 0.0
    %597 = vmatprep.subr.mxu0 0.0
    %598 = vmatpush1.msra.mxu0 0.0
    %599 = vmatprep.subr.mxu0 0.0
    %600 = vmatpush1.msra.mxu0 0.0
    %601 = vmatprep.subr.mxu0 0.0
    %602 = vmatpush1.msra.mxu0 0.0
    %603 = vmatprep.subr.mxu0 0.0
    %604 = vmatpush1.msra.mxu0 0.0
    %605 = vmatprep.subr.mxu0 0.0
    %606 = vmatpush1.msra.mxu0 0.0
    %607 = vmatprep.subr.mxu0 0.0
    %608 = vmatpush1.msra.mxu0 0.0
    %609 = vmatprep.subr.mxu0 0.0
    %610 = vmatpush1.msra.mxu0 0.0
    %611 = vmatprep.subr.mxu0 0.0
    %612 = vmatpush1.msra.mxu0 0.0
    %613 = vmatprep.subr.mxu0 0.0
    %614 = vmatpush1.msra.mxu0 0.0
    %615 = vmatprep.subr.mxu0 0.0
    %616 = vmatpush1.msra.mxu0 0.0
    %617 = vmatprep.mubr.f32.mxu0 0.0
    %618 = vmatmul.mubr.f32.gmra.mrb[0].mxu0 %v480
    %v619 = vpop.f32.mrb[0].mxu0
    %v620 = vadd.f32 %v476, %v619
    %v621 = vpop.f32.mrb[0].mxu0
    %v622 = vadd.f32 %v476, %v621
    %623 = vdwg.mxu0
    %624 = vst [vmem:[#allocation2] sm:$0xff] %v549
    %625 = vst [vmem:[#allocation2 + $0x8] sm:$0xff] %v551
    %626 = vst [vmem:[#allocation2 + $0x10] sm:$0xff] %v620
    %627 = vst [vmem:[#allocation2 + $0x18] sm:$0xff] %v622
    // Predicated region
    $region34: #{tpu_custom_call.1} parent=1 // pred_check
      _
    $region35: #{tpu_custom_call.1} parent=1 // pred_check_branch
      %629 = sbr.rel (0) target = $region37
    $region36: #{tpu_custom_call.1} parent=1 // pred_region
      %s631 = ssub.s32 512, 512
      %632 = vsyncadd [#allocation3], %s631
      %s634 = sshll.u32 [#allocation2], 4
      %s635 = int_to_ptr.vmem [resolvable:$true] %s634
      %637 = dma.vmem_to_hbm [thread:$0]  %s635, 512, %s8, [#allocation3]
    $region37: #{tpu_custom_call.1} parent=1 // pred_fallthru
      _
    // Predicated region
    $region38: #{tpu_custom_call.1} parent=1 // pred_check
      _
    $region39: #{tpu_custom_call.1} parent=1 // pred_check_branch
      %639 = sbr.rel (0) target = $region41
    $region40: #{tpu_custom_call.1} parent=1 // pred_region
      %640 = dma.done [#allocation3], 512
    $region41: #{tpu_custom_call.1} parent=1 // pred_fallthru
      _
    %641 = vsyncpa [#allocation3], 1

</llo_original>
